<compile_context>
chip_gen: v7x
topology: tpu7x:2x2x1
jax: 0.10.0
libtpu: 0.0.40
codegen_flags: <defaults>
</compile_context>

<pallas_src>
import jax
import jax.numpy as jnp
from jax.experimental import pallas as pl
from jax.experimental.pallas import tpu as pltpu


def _tpu_params():
    """Return (usable vmem limit bytes, tensorcores sharing the grid)."""
    kind = ""
    try:
        kind = jax.devices()[0].device_kind.lower()
    except Exception:
        pass

    vmem_phys = None
    try:
        get_info = getattr(pltpu, "get_tpu_info", None)
        if get_info is not None:
            cap = getattr(get_info(), "vmem_capacity_bytes", None)
            if cap:
                vmem_phys = int(cap)
    except Exception:
        pass

    is_v7 = ("v7" in kind) or ("7x" in kind)
    multi_tc = is_v7 or ("v4" in kind) or ("v5p" in kind)

    if vmem_phys is None:
        vmem_phys = (64 << 20) if is_v7 else (128 << 20)

    if is_v7 or vmem_phys <= (64 << 20):
        # v7x-class: 64 MiB per TensorCore; leave ~8 MiB runtime/compiler headroom.
        vmem_limit_cap = max(32 << 20, min(vmem_phys, 64 << 20) - (8 << 20))
    elif multi_tc:
        # v4/v5p megacore (VMEM shared by two TCs): stay conservative per core.
        vmem_limit_cap = 56 << 20
    else:
        # v5e / v6e: single TensorCore, 128 MiB physical VMEM.
        vmem_limit_cap = max(32 << 20, min(vmem_phys, 128 << 20) - (16 << 20))

    num_tc = 2 if multi_tc else 1
    return vmem_limit_cap, num_tc


def _make_se_kernel(channels_last: bool):
    """Kernel factory; `channels_last` selects the slab layout statically."""

    def se_kernel(x_ref, w1t_ref, w2t_ref, o_ref):
        # x block: (Bt, C, HW) [NCHW slab]  or  (Bt, HW, C) [channels-last slab]
        x = x_ref[...]

        # --- squeeze: global average pool over the spatial axis, f32 accum ---
        if channels_last:
            hw = x.shape[1]
            y = jnp.sum(x, axis=1, dtype=jnp.float32) * jnp.float32(1.0 / hw)   # (Bt, C)
        else:
            hw = x.shape[2]
            y = jnp.sum(x, axis=2, dtype=jnp.float32) * jnp.float32(1.0 / hw)   # (Bt, C)

        # --- excitation: FC -> ReLU -> FC -> Sigmoid (plain (m,k)@(k,n)) ---
        w1t = w1t_ref[...].astype(jnp.float32)                                  # (C, hidden)
        w2t = w2t_ref[...].astype(jnp.float32)                                  # (hidden, C)
        h = jnp.maximum(jnp.dot(y, w1t, preferred_element_type=jnp.float32), 0.0)   # (Bt, hidden)
        s = jax.nn.sigmoid(jnp.dot(h, w2t, preferred_element_type=jnp.float32))     # (Bt, C)
        s = s.astype(x.dtype)

        # --- scale: broadcast the per-(batch, channel) gate over spatial ---
        if channels_last:
            o_ref[...] = x * s[:, None, :]
        else:
            o_ref[...] = x * s[:, :, None]

    return se_kernel


def se_layer(x_nchw, w1, w2):
    """x_nchw: (B, C, H, W);  w1: (C//r, C);  w2: (C, C//r)  (PyTorch Linear layout)."""
    B, C, H, W = x_nchw.shape
    HW = H * W
    hidden = w1.shape[0]
    assert w1.shape == (hidden, C) and w2.shape == (C, hidden)

    itemsize = jnp.dtype(x_nchw.dtype).itemsize
    slab_bytes = C * HW * itemsize
    w_bytes = 2 * C * hidden * itemsize

    vmem_limit_cap, num_tc = _tpu_params()

    # Block budget: 4 resident x-blocks (input + output, each double-buffered)
    # + weights + a small margin, all inside the generation-aware VMEM limit.
    max_block_bytes = max(1 << 20, (vmem_limit_cap - 2 * w_bytes - (2 << 20)) // 4)

    # Batch tile: largest divisor of B whose block fits the budget.
    # Multi-TC chips (v7x): keep nb a multiple of the TC count for load
    # balance and prefer Bt a multiple of 8 (full-sublane pooled/gate tiles).
    bt_cap = min(B, max(1, max_block_bytes // max(1, slab_bytes)))
    divisors = [d for d in range(1, bt_cap + 1) if B % d == 0]
    Bt = max(divisors)
    if num_tc > 1 and B >= num_tc:
        balanced = [d for d in divisors if (B // d) % num_tc == 0]
        if balanced:
            mult8 = [d for d in balanced if d % 8 == 0]
            Bt = max(mult8) if mult8 else max(balanced)
    nb = B // Bt

    # Layout: channels-last slab when HW is not lane-aligned but C is, so the
    # last (lane) axis is a full multiple of 128 (no masked partial stores).
    channels_last = (HW % 128 != 0) and (C % 128 == 0)
    if channels_last:
        x3 = jnp.transpose(x_nchw.reshape(B, C, HW), (0, 2, 1))   # (B, HW, C)
        block = (Bt, HW, C)
    else:
        x3 = x_nchw.reshape(B, C, HW)                             # (B, C, HW)
        block = (Bt, C, HW)

    # Pre-transposed weights: both in-kernel dots contract the leading axis of
    # the RHS, so Mosaic does not materialize a per-step weight transpose.
    w1t = jnp.transpose(w1)   # (C, hidden)
    w2t = jnp.transpose(w2)   # (hidden, C)

    block_bytes = Bt * slab_bytes
    vmem_need = 4 * block_bytes + 4 * w_bytes + (2 << 20)
    vmem_limit = int(min(max(vmem_need, 32 << 20), max(vmem_limit_cap, 32 << 20)))
    # TODO(synk): if a single (C, HW) slab ever exceeds the per-TC VMEM budget
    # (huge feature maps), add spatial chunking with a two-pass pool instead of
    # relying on a larger vmem_limit.

    cost = pl.CostEstimate(
        flops=2 * B * C * HW + 4 * B * C * hidden,
        transcendentals=B * C,
        bytes_accessed=2 * B * C * HW * itemsize + w_bytes,
    )

    out3 = pl.pallas_call(
        _make_se_kernel(channels_last),
        out_shape=jax.ShapeDtypeStruct(x3.shape, x_nchw.dtype),
        grid_spec=pltpu.PrefetchScalarGridSpec(
            num_scalar_prefetch=0,
            grid=(nb,),
            in_specs=[
                pl.BlockSpec(block, lambda b: (b, 0, 0)),
                pl.BlockSpec((C, hidden), lambda b: (0, 0)),
                pl.BlockSpec((hidden, C), lambda b: (0, 0)),
            ],
            out_specs=pl.BlockSpec(block, lambda b: (b, 0, 0)),
        ),
        compiler_params=pltpu.CompilerParams(
            dimension_semantics=("parallel",),
            vmem_limit_bytes=vmem_limit,
        ),
        cost_estimate=cost,
    )(x3, w1t, w2t)

    if channels_last:
        return jnp.transpose(out3, (0, 2, 1)).reshape(B, C, H, W)
    return out3.reshape(B, C, H, W)


def se_layer_ref(x, w1, w2):
    """Pure-JAX reference mirroring the PyTorch forward."""
    y = jnp.mean(x.astype(jnp.float32), axis=(2, 3))           # (B, C)
    h = jnp.maximum(y @ w1.T, 0.0)                             # (B, C//r)
    s = jax.nn.sigmoid(h @ w2.T)                               # (B, C)
    return x * s[:, :, None, None].astype(x.dtype)


if __name__ == "__main__":
    # Small shapes consistent with the module: channels divisible by reduction=16.
    B, C, H, W = 2, 64, 16, 16
    reduction = 16
    hidden = C // reduction  # 4

    key = jax.random.PRNGKey(0)
    kx, k1, k2 = jax.random.split(key, 3)

    x = jax.random.normal(kx, (B, C, H, W), dtype=jnp.float32)
    # PyTorch Linear weight layout: (out_features, in_features).
    w1 = jax.random.normal(k1, (hidden, C), dtype=jnp.float32) * 0.1
    w2 = jax.random.normal(k2, (C, hidden), dtype=jnp.float32) * 0.1

    out = se_layer(x, w1, w2)
    out = jax.block_until_ready(out)

    ref = se_layer_ref(x, w1, w2)
    assert out.shape == (B, C, H, W)
    assert jnp.allclose(out, ref, atol=1e-5, rtol=1e-5), "mismatch vs reference"

    print("KERNEL_OK")
</pallas_src>

<mosaic_0001>
module attributes {stable_mosaic.version = 11 : i64} {
  func.func @se_kernel(%arg0: i32, %arg1: memref<2x64x256xf32, #tpu.memory_space<vmem>>, %arg2: memref<64x4xf32, #tpu.memory_space<vmem>>, %arg3: memref<4x64xf32, #tpu.memory_space<vmem>>, %arg4: memref<2x64x256xf32, #tpu.memory_space<vmem>>) attributes {dimension_semantics = [#tpu.dimension_semantics<parallel>], iteration_bounds = array<i64: 1>, scalar_prefetch = 0 : i64, scratch_operands = 0 : i64, tpu.core_type = #tpu.core_type<tc>, window_params = [{transform_indices = @transform_0, window_bounds = array<i64: 2, 64, 256>}, {pipeline_mode = #tpu.pipeline_mode<synchronous>, transform_indices = @transform_1, window_bounds = array<i64: 64, 4>}, {pipeline_mode = #tpu.pipeline_mode<synchronous>, transform_indices = @transform_2, window_bounds = array<i64: 4, 64>}, {transform_indices = @transform_3, window_bounds = array<i64: 2, 64, 256>}]} {
    %c0 = arith.constant 0 : index
    %c0_0 = arith.constant 0 : index
    %c0_1 = arith.constant 0 : index
    %0 = vector.load %arg1[%c0, %c0_0, %c0_1] : memref<2x64x256xf32, #tpu.memory_space<vmem>>, vector<2x64x256xf32>
    %cst = arith.constant dense<0.000000e+00> : vector<2x64xf32>
    %1 = vector.multi_reduction <add>, %0, %cst [2] : vector<2x64x256xf32> to vector<2x64xf32>
    %cst_2 = arith.constant 3.906250e-03 : f32
    %2 = vector.broadcast %cst_2 : f32 to vector<2x64xf32>
    %3 = arith.mulf %1, %2 : vector<2x64xf32>
    %c0_3 = arith.constant 0 : index
    %c0_4 = arith.constant 0 : index
    %4 = vector.load %arg2[%c0_3, %c0_4] : memref<64x4xf32, #tpu.memory_space<vmem>>, vector<64x4xf32>
    %c0_5 = arith.constant 0 : index
    %c0_6 = arith.constant 0 : index
    %5 = vector.load %arg3[%c0_5, %c0_6] : memref<4x64xf32, #tpu.memory_space<vmem>>, vector<4x64xf32>
    %cst_7 = arith.constant dense<0.000000e+00> : vector<2x4xf32>
    %6 = tpu.matmul %3, %4, %cst_7 {dimension_numbers = #tpu.dot_dimension_numbers<[1], [0], [0], [1], [0, 0, 1, 1], [], []>} : vector<2x64xf32>, vector<64x4xf32>, vector<2x4xf32> -> vector<2x4xf32>
    %cst_8 = arith.constant 0.000000e+00 : f32
    %7 = vector.broadcast %cst_8 : f32 to vector<2x4xf32>
    %8 = arith.maximumf %6, %7 : vector<2x4xf32>
    %cst_9 = arith.constant dense<0.000000e+00> : vector<2x64xf32>
    %9 = tpu.matmul %8, %5, %cst_9 {dimension_numbers = #tpu.dot_dimension_numbers<[1], [0], [0], [1], [0, 0, 1, 1], [], []>} : vector<2x4xf32>, vector<4x64xf32>, vector<2x64xf32> -> vector<2x64xf32>
    %10 = arith.negf %9 : vector<2x64xf32>
    %11 = math.exp %10 : vector<2x64xf32>
    %cst_10 = arith.constant 1.000000e+00 : f32
    %12 = vector.broadcast %cst_10 : f32 to vector<2x64xf32>
    %13 = arith.addf %12, %11 : vector<2x64xf32>
    %14 = arith.divf %12, %13 : vector<2x64xf32>
    %15 = vector.shape_cast %14 : vector<2x64xf32> to vector<2x64x1xf32>
    %16 = vector.broadcast %15 : vector<2x64x1xf32> to vector<2x64x256xf32>
    %17 = arith.mulf %0, %16 : vector<2x64x256xf32>
    %c0_11 = arith.constant 0 : index
    %c0_12 = arith.constant 0 : index
    %c0_13 = arith.constant 0 : index
    %18 = vector.load %arg4[%c0_11, %c0_12, %c0_13] : memref<2x64x256xf32, #tpu.memory_space<vmem>>, vector<2x64x256xf32>
    tpu.vector_store %arg4[%c0_11, %c0_12, %c0_13], %17 {strides = array<i32>} : memref<2x64x256xf32, #tpu.memory_space<vmem>>, vector<2x64x256xf32>,
    return
  }
  func.func @transform_0(%arg0: i32) -> (i32, i32, i32) {
    %c0_i32 = arith.constant 0 : i32
    %c0_i32_0 = arith.constant 0 : i32
    %c0_i32_1 = arith.constant 0 : i32
    return %arg0, %c0_i32, %c0_i32_0 : i32, i32, i32
  }
  func.func @transform_1(%arg0: i32) -> (i32, i32) {
    %c0_i32 = arith.constant 0 : i32
    %c0_i32_0 = arith.constant 0 : i32
    %c0_i32_1 = arith.constant 0 : i32
    return %c0_i32, %c0_i32_0 : i32, i32
  }
  func.func @transform_2(%arg0: i32) -> (i32, i32) {
    %c0_i32 = arith.constant 0 : i32
    %c0_i32_0 = arith.constant 0 : i32
    %c0_i32_1 = arith.constant 0 : i32
    return %c0_i32, %c0_i32_0 : i32, i32
  }
  func.func @transform_3(%arg0: i32) -> (i32, i32, i32) {
    %c0_i32 = arith.constant 0 : i32
    %c0_i32_0 = arith.constant 0 : i32
    %c0_i32_1 = arith.constant 0 : i32
    return %arg0, %c0_i32, %c0_i32_0 : i32, i32, i32
  }
}

</mosaic_0001>

<llo_original>
// kernel: tpu_custom_call.1
$region0: #{tpu_custom_call.1}
  #allocation0 [shape = 'u32[]', space=smem, size = 0x4, offset = 0x4, fixed_abs, tag = 'smem constant byte address 0x4 - core index']
  #allocation1 [shape = 'u32[144,128]{1,0:T(1,128)}', space=vmem, size = 0x12000, scoped, tag = 'internal scratch']
  %s0 = inlined_call_operand.hbm [shape: f32[2,64,256], index: 0, kind: input, shape index: {}]
  %s1 = inlined_call_operand.vmem [shape: f32[64,4], index: 1, kind: input, shape index: {}]
  %s2 = inlined_call_operand.vmem [shape: f32[4,64], index: 2, kind: input, shape index: {}]
  %s3 = inlined_call_operand.hbm [shape: f32[2,64,256], index: 3, kind: output, shape index: {}]
  %s4 = sld [smem:[#allocation0]]
  $region26: #{tpu_custom_call.1} parent=0
    _
  %s6 = ssub.s32 1, %s4
  %s7 = scalar_select 0, %s6, %s4
  $region1: #{tpu_custom_call.1} parent=0
    #allocation2 [shape = 'u8[131072]{0}', space=vmem, size = 0x20000, scoped, tag = 'input window, operand 0, single buffered']
    #allocation3 [shape = 's32[1]{0}', space=sflag, size = 0x4, scoped, tag = 'scoped memory for tpu_custom_call.1']
    #allocation4 [shape = 's32[1]{0}', space=sflag, size = 0x4, scoped, tag = 'scoped memory for tpu_custom_call.1']
    #allocation5 [shape = 'u8[131072]{0}', space=vmem, size = 0x20000, scoped, tag = 'output window, operand 0, single buffered']
    %8 = vsyncpa [#allocation3], 0
    %9 = vsyncpa [#allocation4], 0
    // Predicated region
    $region2: #{tpu_custom_call.1} parent=1 // pred_check
      _
    $region3: #{tpu_custom_call.1} parent=1 // pred_check_branch
      %11 = sbr.rel (0) target = $region5
    $region4: #{tpu_custom_call.1} parent=1 // pred_region
      %s13 = ssub.s32 4096, 4096
      %14 = vsyncadd [#allocation3], %s13
      %s15 = sshll.u32 [#allocation2], 4
      %s16 = int_to_ptr.vmem [resolvable:$true] %s15
      %21 = dma.hbm_to_vmem [thread:$0]  %s0, 4096, %s16, [#allocation3], 256, 256, 16
    $region5: #{tpu_custom_call.1} parent=1 // pred_fallthru
      _
    // Predicated region
    $region6: #{tpu_custom_call.1} parent=1 // pred_check
      _
    $region7: #{tpu_custom_call.1} parent=1 // pred_check_branch
      %23 = sbr.rel (0) target = $region9
    $region8: #{tpu_custom_call.1} parent=1 // pred_region
      _
    $region9: #{tpu_custom_call.1} parent=1 // pred_fallthru
      _
    // Predicated region
    $region10: #{tpu_custom_call.1} parent=1 // pred_check
      _
    $region11: #{tpu_custom_call.1} parent=1 // pred_check_branch
      %25 = sbr.rel (0) target = $region13
    $region12: #{tpu_custom_call.1} parent=1 // pred_region
      _
    $region13: #{tpu_custom_call.1} parent=1 // pred_fallthru
      _
    // Predicated region
    $region14: #{tpu_custom_call.1} parent=1 // pred_check
      _
    $region15: #{tpu_custom_call.1} parent=1 // pred_check_branch
      %27 = sbr.rel (0) target = $region17
    $region16: #{tpu_custom_call.1} parent=1 // pred_region
      %28 = dma.done [#allocation3], 4096
    $region17: #{tpu_custom_call.1} parent=1 // pred_fallthru
      _
    %v29 = vld [vmem:[#allocation2] sm:$0xff]
    %v30 = vld [vmem:[#allocation2 + $0x8] sm:$0xff]
    %v31 = vld [vmem:[#allocation2 + $0x10] sm:$0xff]
    %v32 = vld [vmem:[#allocation2 + $0x18] sm:$0xff]
    %v33 = vld [vmem:[#allocation2 + $0x20] sm:$0xff]
    %v34 = vld [vmem:[#allocation2 + $0x28] sm:$0xff]
    %v35 = vld [vmem:[#allocation2 + $0x30] sm:$0xff]
    %v36 = vld [vmem:[#allocation2 + $0x38] sm:$0xff]
    %v37 = vld [vmem:[#allocation2 + $0x40] sm:$0xff]
    %v38 = vld [vmem:[#allocation2 + $0x48] sm:$0xff]
    %v39 = vld [vmem:[#allocation2 + $0x50] sm:$0xff]
    %v40 = vld [vmem:[#allocation2 + $0x58] sm:$0xff]
    %v41 = vld [vmem:[#allocation2 + $0x60] sm:$0xff]
    %v42 = vld [vmem:[#allocation2 + $0x68] sm:$0xff]
    %v43 = vld [vmem:[#allocation2 + $0x70] sm:$0xff]
    %v44 = vld [vmem:[#allocation2 + $0x78] sm:$0xff]
    %v45 = vld [vmem:[#allocation2 + $0x80] sm:$0xff]
    %v46 = vld [vmem:[#allocation2 + $0x88] sm:$0xff]
    %v47 = vld [vmem:[#allocation2 + $0x90] sm:$0xff]
    %v48 = vld [vmem:[#allocation2 + $0x98] sm:$0xff]
    %v49 = vld [vmem:[#allocation2 + $0xa0] sm:$0xff]
    %v50 = vld [vmem:[#allocation2 + $0xa8] sm:$0xff]
    %v51 = vld [vmem:[#allocation2 + $0xb0] sm:$0xff]
    %v52 = vld [vmem:[#allocation2 + $0xb8] sm:$0xff]
    %v53 = vld [vmem:[#allocation2 + $0xc0] sm:$0xff]
    %v54 = vld [vmem:[#allocation2 + $0xc8] sm:$0xff]
    %v55 = vld [vmem:[#allocation2 + $0xd0] sm:$0xff]
    %v56 = vld [vmem:[#allocation2 + $0xd8] sm:$0xff]
    %v57 = vld [vmem:[#allocation2 + $0xe0] sm:$0xff]
    %v58 = vld [vmem:[#allocation2 + $0xe8] sm:$0xff]
    %v59 = vld [vmem:[#allocation2 + $0xf0] sm:$0xff]
    %v60 = vld [vmem:[#allocation2 + $0xf8] sm:$0xff]
    %v61 = vadd.f32 %v29, %v30
    %62 = vadd.xlane.f32.xlu0 %v61
    %v63 = vpop.xlane.xlu0 %62
    %v64 = vadd.f32 %v31, %v32
    %65 = vadd.xlane.f32.xlu0 %v64
    %v66 = vpop.xlane.xlu0 %65
    %v67 = vadd.f32 %v33, %v34
    %68 = vadd.xlane.f32.xlu0 %v67
    %v69 = vpop.xlane.xlu0 %68
    %v70 = vadd.f32 %v35, %v36
    %71 = vadd.xlane.f32.xlu0 %v70
    %v72 = vpop.xlane.xlu0 %71
    %v73 = vadd.f32 %v37, %v38
    %74 = vadd.xlane.f32.xlu0 %v73
    %v75 = vpop.xlane.xlu0 %74
    %v76 = vadd.f32 %v39, %v40
    %77 = vadd.xlane.f32.xlu0 %v76
    %v78 = vpop.xlane.xlu0 %77
    %v79 = vadd.f32 %v41, %v42
    %80 = vadd.xlane.f32.xlu0 %v79
    %v81 = vpop.xlane.xlu0 %80
    %v82 = vadd.f32 %v43, %v44
    %83 = vadd.xlane.f32.xlu0 %v82
    %v84 = vpop.xlane.xlu0 %83
    %v85 = vadd.f32 %v45, %v46
    %86 = vadd.xlane.f32.xlu0 %v85
    %v87 = vpop.xlane.xlu0 %86
    %v88 = vadd.f32 %v47, %v48
    %89 = vadd.xlane.f32.xlu0 %v88
    %v90 = vpop.xlane.xlu0 %89
    %v91 = vadd.f32 %v49, %v50
    %92 = vadd.xlane.f32.xlu0 %v91
    %v93 = vpop.xlane.xlu0 %92
    %v94 = vadd.f32 %v51, %v52
    %95 = vadd.xlane.f32.xlu0 %v94
    %v96 = vpop.xlane.xlu0 %95
    %v97 = vadd.f32 %v53, %v54
    %98 = vadd.xlane.f32.xlu0 %v97
    %v99 = vpop.xlane.xlu0 %98
    %v100 = vadd.f32 %v55, %v56
    %101 = vadd.xlane.f32.xlu0 %v100
    %v102 = vpop.xlane.xlu0 %101
    %v103 = vadd.f32 %v57, %v58
    %104 = vadd.xlane.f32.xlu0 %v103
    %v105 = vpop.xlane.xlu0 %104
    %v106 = vadd.f32 %v59, %v60
    %107 = vadd.xlane.f32.xlu0 %v106
    %v108 = vpop.xlane.xlu0 %107
    %v109 = vmul.f32 %v63, 0.00390625
    %v110 = vmul.f32 %v66, 0.00390625
    %v111 = vmul.f32 %v69, 0.00390625
    %v112 = vmul.f32 %v72, 0.00390625
    %v113 = vmul.f32 %v75, 0.00390625
    %v114 = vmul.f32 %v78, 0.00390625
    %v115 = vmul.f32 %v81, 0.00390625
    %v116 = vmul.f32 %v84, 0.00390625
    %v117 = vmul.f32 %v87, 0.00390625
    %v118 = vmul.f32 %v90, 0.00390625
    %v119 = vmul.f32 %v93, 0.00390625
    %v120 = vmul.f32 %v96, 0.00390625
    %v121 = vmul.f32 %v99, 0.00390625
    %v122 = vmul.f32 %v102, 0.00390625
    %v123 = vmul.f32 %v105, 0.00390625
    %v124 = vmul.f32 %v108, 0.00390625
    %v125 = vld [vmem:[%s1] sm:$0xff]
    %v126 = vld [vmem:[%s1 + $0x8] sm:$0xff]
    %v127 = vld [vmem:[%s1 + $0x10] sm:$0xff]
    %v128 = vld [vmem:[%s1 + $0x18] sm:$0xff]
    %v129 = vld [vmem:[%s1 + $0x20] sm:$0xff]
    %v130 = vld [vmem:[%s1 + $0x28] sm:$0xff]
    %v131 = vld [vmem:[%s1 + $0x30] sm:$0xff]
    %v132 = vld [vmem:[%s1 + $0x38] sm:$0xff]
    %v133 = vld [vmem:[%s2] sm:$0xf]
    %v150 = vlaneseq
    %v151 = vand.u32 %v150, 127
    %v152 = vlaneseq
    %v153 = vshrl.u32 %v152, 7
    %v154 = vsub.s32 %v151, %v153
    %v155 = vrot.slane %v109, %v154
    %v156 = vadd.s32 %v151, 4294967288
    %v157 = vlaneseq
    %v158 = vshrl.u32 %v157, 7
    %v159 = vsub.s32 %v156, %v158
    %v160 = vrot.slane %v110, %v159
    %vm161 = vcmask 130112
    %v162 = vsel %vm161, %v160, %v155
    %v163 = vadd.s32 %v151, 4294967280
    %v164 = vlaneseq
    %v165 = vshrl.u32 %v164, 7
    %v166 = vsub.s32 %v163, %v165
    %v167 = vrot.slane %v111, %v166
    %vm168 = vcmask 195712
    %v169 = vsel %vm168, %v167, %v162
    %v170 = vadd.s32 %v151, 4294967272
    %v171 = vlaneseq
    %v172 = vshrl.u32 %v171, 7
    %v173 = vsub.s32 %v170, %v172
    %v174 = vrot.slane %v112, %v173
    %vm175 = vcmask 261312
    %v176 = vsel %vm175, %v174, %v169
    %v177 = vadd.s32 %v151, 4294967264
    %v178 = vlaneseq
    %v179 = vshrl.u32 %v178, 7
    %v180 = vsub.s32 %v177, %v179
    %v181 = vrot.slane %v113, %v180
    %vm182 = vcmask 326912
    %v183 = vsel %vm182, %v181, %v176
    %v184 = vadd.s32 %v151, 4294967256
    %v185 = vlaneseq
    %v186 = vshrl.u32 %v185, 7
    %v187 = vsub.s32 %v184, %v186
    %v188 = vrot.slane %v114, %v187
    %vm189 = vcmask 392512
    %v190 = vsel %vm189, %v188, %v183
    %v191 = vadd.s32 %v151, 4294967248
    %v192 = vlaneseq
    %v193 = vshrl.u32 %v192, 7
    %v194 = vsub.s32 %v191, %v193
    %v195 = vrot.slane %v115, %v194
    %vm196 = vcmask 458112
    %v197 = vsel %vm196, %v195, %v190
    %v198 = vadd.s32 %v151, 4294967240
    %v199 = vlaneseq
    %v200 = vshrl.u32 %v199, 7
    %v201 = vsub.s32 %v198, %v200
    %v202 = vrot.slane %v116, %v201
    %vm203 = vcmask 523712
    %v204 = vsel %vm203, %v202, %v197
    %v205 = vlaneseq
    %v206 = vshrl.u32 %v205, 7
    %v207 = vsub.s32 %v151, %v206
    %v208 = vrot.slane %v117, %v207
    %v209 = vlaneseq
    %v210 = vshrl.u32 %v209, 7
    %v211 = vsub.s32 %v156, %v210
    %v212 = vrot.slane %v118, %v211
    %v213 = vsel %vm161, %v212, %v208
    %v214 = vlaneseq
    %v215 = vshrl.u32 %v214, 7
    %v216 = vsub.s32 %v163, %v215
    %v217 = vrot.slane %v119, %v216
    %v218 = vsel %vm168, %v217, %v213
    %v219 = vlaneseq
    %v220 = vshrl.u32 %v219, 7
    %v221 = vsub.s32 %v170, %v220
    %v222 = vrot.slane %v120, %v221
    %v223 = vsel %vm175, %v222, %v218
    %v224 = vlaneseq
    %v225 = vshrl.u32 %v224, 7
    %v226 = vsub.s32 %v177, %v225
    %v227 = vrot.slane %v121, %v226
    %v228 = vsel %vm182, %v227, %v223
    %v229 = vlaneseq
    %v230 = vshrl.u32 %v229, 7
    %v231 = vsub.s32 %v184, %v230
    %v232 = vrot.slane %v122, %v231
    %v233 = vsel %vm189, %v232, %v228
    %v234 = vlaneseq
    %v235 = vshrl.u32 %v234, 7
    %v236 = vsub.s32 %v191, %v235
    %v237 = vrot.slane %v123, %v236
    %v238 = vsel %vm196, %v237, %v233
    %v239 = vlaneseq
    %v240 = vshrl.u32 %v239, 7
    %v241 = vsub.s32 %v198, %v240
    %v242 = vrot.slane %v124, %v241
    %v243 = vsel %vm203, %v242, %v238
    %vm244 = vcmask 1041409
    %v245 = vsel %vm244, %v243, %v204
    %vm246 = vcmask 523264
    %v247 = vsel %vm246, %v245, 0
    %249 = vmatprep.subr.mxu0 0.0
    %250 = vmatpush1.msra.mxu0 %v125
    %251 = vmatprep.subr.mxu0 0.0
    %252 = vmatpush1.msra.mxu0 %v126
    %253 = vmatprep.subr.mxu0 0.0
    %254 = vmatpush1.msra.mxu0 %v127
    %255 = vmatprep.subr.mxu0 0.0
    %256 = vmatpush1.msra.mxu0 %v128
    %257 = vmatprep.subr.mxu0 0.0
    %258 = vmatpush1.msra.mxu0 %v129
    %259 = vmatprep.subr.mxu0 0.0
    %260 = vmatpush1.msra.mxu0 %v130
    %261 = vmatprep.subr.mxu0 0.0
    %262 = vmatpush1.msra.mxu0 %v131
    %263 = vmatprep.subr.mxu0 0.0
    %264 = vmatpush1.msra.mxu0 %v132
    %265 = vmatprep.subr.mxu0 0.0
    %266 = vmatpush1.msra.mxu0 0.0
    %267 = vmatprep.subr.mxu0 0.0
    %268 = vmatpush1.msra.mxu0 0.0
    %269 = vmatprep.subr.mxu0 0.0
    %270 = vmatpush1.msra.mxu0 0.0
    %271 = vmatprep.subr.mxu0 0.0
    %272 = vmatpush1.msra.mxu0 0.0
    %273 = vmatprep.subr.mxu0 0.0
    %274 = vmatpush1.msra.mxu0 0.0
    %275 = vmatprep.subr.mxu0 0.0
    %276 = vmatpush1.msra.mxu0 0.0
    %277 = vmatprep.subr.mxu0 0.0
    %278 = vmatpush1.msra.mxu0 0.0
    %279 = vmatprep.subr.mxu0 0.0
    %280 = vmatpush1.msra.mxu0 0.0
    %281 = vmatprep.subr.mxu0 0.0
    %282 = vmatpush1.msra.mxu0 0.0
    %283 = vmatprep.subr.mxu0 0.0
    %284 = vmatpush1.msra.mxu0 0.0
    %285 = vmatprep.subr.mxu0 0.0
    %286 = vmatpush1.msra.mxu0 0.0
    %287 = vmatprep.subr.mxu0 0.0
    %288 = vmatpush1.msra.mxu0 0.0
    %289 = vmatprep.subr.mxu0 0.0
    %290 = vmatpush1.msra.mxu0 0.0
    %291 = vmatprep.subr.mxu0 0.0
    %292 = vmatpush1.msra.mxu0 0.0
    %293 = vmatprep.subr.mxu0 0.0
    %294 = vmatpush1.msra.mxu0 0.0
    %295 = vmatprep.subr.mxu0 0.0
    %296 = vmatpush1.msra.mxu0 0.0
    %297 = vmatprep.subr.mxu0 0.0
    %298 = vmatpush1.msra.mxu0 0.0
    %299 = vmatprep.subr.mxu0 0.0
    %300 = vmatpush1.msra.mxu0 0.0
    %301 = vmatprep.subr.mxu0 0.0
    %302 = vmatpush1.msra.mxu0 0.0
    %303 = vmatprep.subr.mxu0 0.0
    %304 = vmatpush1.msra.mxu0 0.0
    %305 = vmatprep.subr.mxu0 0.0
    %306 = vmatpush1.msra.mxu0 0.0
    %307 = vmatprep.subr.mxu0 0.0
    %308 = vmatpush1.msra.mxu0 0.0
    %309 = vmatprep.subr.mxu0 0.0
    %310 = vmatpush1.msra.mxu0 0.0
    %311 = vmatprep.subr.mxu0 0.0
    %312 = vmatpush1.msra.mxu0 0.0
    %313 = vmatprep.mubr.f32.mxu0 0.0
    %314 = vmatmul.mubr.f32.gmra.mrb[0].mxu0 %v247
    %v315 = vpop.f32.mrb[0].mxu0
    %v316 = vadd.f32 0.0, %v315
    %v317 = vpop.f32.mrb[0].mxu0
    %318 = vdwg.mxu0
    %v319 = vmax.f32 %v316, 0.0
    %vm320 = vcmask 31744
    %v322 = vsel %vm320, %v319, 0
    %vm324 = vcmask 1043456
    %v326 = vsel %vm324, %v133, 0
    %328 = vmatprep.subr.mxu0 0.0
    %329 = vmatpush1.msra.mxu0 %v326
    %330 = vmatprep.subr.mxu0 0.0
    %331 = vmatpush1.msra.mxu0 0.0
    %332 = vmatprep.subr.mxu0 0.0
    %333 = vmatpush1.msra.mxu0 0.0
    %334 = vmatprep.subr.mxu0 0.0
    %335 = vmatpush1.msra.mxu0 0.0
    %336 = vmatprep.subr.mxu0 0.0
    %337 = vmatpush1.msra.mxu0 0.0
    %338 = vmatprep.subr.mxu0 0.0
    %339 = vmatpush1.msra.mxu0 0.0
    %340 = vmatprep.subr.mxu0 0.0
    %341 = vmatpush1.msra.mxu0 0.0
    %342 = vmatprep.subr.mxu0 0.0
    %343 = vmatpush1.msra.mxu0 0.0
    %344 = vmatprep.subr.mxu0 0.0
    %345 = vmatpush1.msra.mxu0 0.0
    %346 = vmatprep.subr.mxu0 0.0
    %347 = vmatpush1.msra.mxu0 0.0
    %348 = vmatprep.subr.mxu0 0.0
    %349 = vmatpush1.msra.mxu0 0.0
    %350 = vmatprep.subr.mxu0 0.0
    %351 = vmatpush1.msra.mxu0 0.0
    %352 = vmatprep.subr.mxu0 0.0
    %353 = vmatpush1.msra.mxu0 0.0
    %354 = vmatprep.subr.mxu0 0.0
    %355 = vmatpush1.msra.mxu0 0.0
    %356 = vmatprep.subr.mxu0 0.0
    %357 = vmatpush1.msra.mxu0 0.0
    %358 = vmatprep.subr.mxu0 0.0
    %359 = vmatpush1.msra.mxu0 0.0
    %360 = vmatprep.subr.mxu0 0.0
    %361 = vmatpush1.msra.mxu0 0.0
    %362 = vmatprep.subr.mxu0 0.0
    %363 = vmatpush1.msra.mxu0 0.0
    %364 = vmatprep.subr.mxu0 0.0
    %365 = vmatpush1.msra.mxu0 0.0
    %366 = vmatprep.subr.mxu0 0.0
    %367 = vmatpush1.msra.mxu0 0.0
    %368 = vmatprep.subr.mxu0 0.0
    %369 = vmatpush1.msra.mxu0 0.0
    %370 = vmatprep.subr.mxu0 0.0
    %371 = vmatpush1.msra.mxu0 0.0
    %372 = vmatprep.subr.mxu0 0.0
    %373 = vmatpush1.msra.mxu0 0.0
    %374 = vmatprep.subr.mxu0 0.0
    %375 = vmatpush1.msra.mxu0 0.0
    %376 = vmatprep.subr.mxu0 0.0
    %377 = vmatpush1.msra.mxu0 0.0
    %378 = vmatprep.subr.mxu0 0.0
    %379 = vmatpush1.msra.mxu0 0.0
    %380 = vmatprep.subr.mxu0 0.0
    %381 = vmatpush1.msra.mxu0 0.0
    %382 = vmatprep.subr.mxu0 0.0
    %383 = vmatpush1.msra.mxu0 0.0
    %384 = vmatprep.subr.mxu0 0.0
    %385 = vmatpush1.msra.mxu0 0.0
    %386 = vmatprep.subr.mxu0 0.0
    %387 = vmatpush1.msra.mxu0 0.0
    %388 = vmatprep.subr.mxu0 0.0
    %389 = vmatpush1.msra.mxu0 0.0
    %390 = vmatprep.subr.mxu0 0.0
    %391 = vmatpush1.msra.mxu0 0.0
    %392 = vmatprep.mubr.f32.mxu0 0.0
    %393 = vmatmul.mubr.f32.gmra.mrb[0].mxu0 %v322
    %v394 = vpop.f32.mrb[0].mxu0
    %v395 = vadd.f32 0.0, %v394
    %v396 = vpop.f32.mrb[0].mxu0
    %397 = vdwg.mxu0
    %v398 = vxor.u32 %v395, 2147483648
    %v399 = vmul.f32 %v398, 1.442695
    %v400 = vpow.pop %v399
    %v401 = vadd.f32 %v400, 1.0
    %v402 = vrcp.pop %v401
    %v403 = vmul.f32 1.0, %v402
    %v404 = vlaneseq
    %v405 = vshrl.u32 %v404, 7
    %v406 = vsub.s32 0, %v405
    %v407 = vrot.slane %v403, %v406
    %409 = vbcast.lane.b32.xlu0 %v407, 256
    %v410 = vpop.permute.xlu0 %409
    %s412 = sor.u32 256, 8
    %413 = vbcast.lane.b32.xlu0 %v407, %s412
    %v414 = vpop.permute.xlu0 %413
    %s416 = sor.u32 256, 16
    %417 = vbcast.lane.b32.xlu0 %v407, %s416
    %v418 = vpop.permute.xlu0 %417
    %s420 = sor.u32 256, 24
    %421 = vbcast.lane.b32.xlu0 %v407, %s420
    %v422 = vpop.permute.xlu0 %421
    %s424 = sor.u32 256, 32
    %425 = vbcast.lane.b32.xlu0 %v407, %s424
    %v426 = vpop.permute.xlu0 %425
    %s428 = sor.u32 256, 40
    %429 = vbcast.lane.b32.xlu0 %v407, %s428
    %v430 = vpop.permute.xlu0 %429
    %s432 = sor.u32 256, 48
    %433 = vbcast.lane.b32.xlu0 %v407, %s432
    %v434 = vpop.permute.xlu0 %433
    %s436 = sor.u32 256, 56
    %437 = vbcast.lane.b32.xlu0 %v407, %s436
    %v438 = vpop.permute.xlu0 %437
    %v439 = vlaneseq
    %v440 = vshrl.u32 %v439, 7
    %v441 = vsub.s32 1, %v440
    %v442 = vrot.slane %v403, %v441
    %444 = vbcast.lane.b32.xlu0 %v442, 256
    %v445 = vpop.permute.xlu0 %444
    %s447 = sor.u32 256, 8
    %448 = vbcast.lane.b32.xlu0 %v442, %s447
    %v449 = vpop.permute.xlu0 %448
    %s451 = sor.u32 256, 16
    %452 = vbcast.lane.b32.xlu0 %v442, %s451
    %v453 = vpop.permute.xlu0 %452
    %s455 = sor.u32 256, 24
    %456 = vbcast.lane.b32.xlu0 %v442, %s455
    %v457 = vpop.permute.xlu0 %456
    %s459 = sor.u32 256, 32
    %460 = vbcast.lane.b32.xlu0 %v442, %s459
    %v461 = vpop.permute.xlu0 %460
    %s463 = sor.u32 256, 40
    %464 = vbcast.lane.b32.xlu0 %v442, %s463
    %v465 = vpop.permute.xlu0 %464
    %s467 = sor.u32 256, 48
    %468 = vbcast.lane.b32.xlu0 %v442, %s467
    %v469 = vpop.permute.xlu0 %468
    %s471 = sor.u32 256, 56
    %472 = vbcast.lane.b32.xlu0 %v442, %s471
    %v473 = vpop.permute.xlu0 %472
    %v474 = vmul.f32 %v29, %v410
    %v475 = vmul.f32 %v30, %v410
    %v476 = vmul.f32 %v31, %v414
    %v477 = vmul.f32 %v32, %v414
    %v478 = vmul.f32 %v33, %v418
    %v479 = vmul.f32 %v34, %v418
    %v480 = vmul.f32 %v35, %v422
    %v481 = vmul.f32 %v36, %v422
    %v482 = vmul.f32 %v37, %v426
    %v483 = vmul.f32 %v38, %v426
    %v484 = vmul.f32 %v39, %v430
    %v485 = vmul.f32 %v40, %v430
    %v486 = vmul.f32 %v41, %v434
    %v487 = vmul.f32 %v42, %v434
    %v488 = vmul.f32 %v43, %v438
    %v489 = vmul.f32 %v44, %v438
    %v490 = vmul.f32 %v45, %v445
    %v491 = vmul.f32 %v46, %v445
    %v492 = vmul.f32 %v47, %v449
    %v493 = vmul.f32 %v48, %v449
    %v494 = vmul.f32 %v49, %v453
    %v495 = vmul.f32 %v50, %v453
    %v496 = vmul.f32 %v51, %v457
    %v497 = vmul.f32 %v52, %v457
    %v498 = vmul.f32 %v53, %v461
    %v499 = vmul.f32 %v54, %v461
    %v500 = vmul.f32 %v55, %v465
    %v501 = vmul.f32 %v56, %v465
    %v502 = vmul.f32 %v57, %v469
    %v503 = vmul.f32 %v58, %v469
    %v504 = vmul.f32 %v59, %v473
    %v505 = vmul.f32 %v60, %v473
    %506 = vst [vmem:[#allocation5] sm:$0xff] %v474
    %507 = vst [vmem:[#allocation5 + $0x8] sm:$0xff] %v475
    %508 = vst [vmem:[#allocation5 + $0x10] sm:$0xff] %v476
    %509 = vst [vmem:[#allocation5 + $0x18] sm:$0xff] %v477
    %510 = vst [vmem:[#allocation5 + $0x20] sm:$0xff] %v478
    %511 = vst [vmem:[#allocation5 + $0x28] sm:$0xff] %v479
    %512 = vst [vmem:[#allocation5 + $0x30] sm:$0xff] %v480
    %513 = vst [vmem:[#allocation5 + $0x38] sm:$0xff] %v481
    %514 = vst [vmem:[#allocation5 + $0x40] sm:$0xff] %v482
    %515 = vst [vmem:[#allocation5 + $0x48] sm:$0xff] %v483
    %516 = vst [vmem:[#allocation5 + $0x50] sm:$0xff] %v484
    %517 = vst [vmem:[#allocation5 + $0x58] sm:$0xff] %v485
    %518 = vst [vmem:[#allocation5 + $0x60] sm:$0xff] %v486
    %519 = vst [vmem:[#allocation5 + $0x68] sm:$0xff] %v487
    %520 = vst [vmem:[#allocation5 + $0x70] sm:$0xff] %v488
    %521 = vst [vmem:[#allocation5 + $0x78] sm:$0xff] %v489
    %522 = vst [vmem:[#allocation5 + $0x80] sm:$0xff] %v490
    %523 = vst [vmem:[#allocation5 + $0x88] sm:$0xff] %v491
    %524 = vst [vmem:[#allocation5 + $0x90] sm:$0xff] %v492
    %525 = vst [vmem:[#allocation5 + $0x98] sm:$0xff] %v493
    %526 = vst [vmem:[#allocation5 + $0xa0] sm:$0xff] %v494
    %527 = vst [vmem:[#allocation5 + $0xa8] sm:$0xff] %v495
    %528 = vst [vmem:[#allocation5 + $0xb0] sm:$0xff] %v496
    %529 = vst [vmem:[#allocation5 + $0xb8] sm:$0xff] %v497
    %530 = vst [vmem:[#allocation5 + $0xc0] sm:$0xff] %v498
    %531 = vst [vmem:[#allocation5 + $0xc8] sm:$0xff] %v499
    %532 = vst [vmem:[#allocation5 + $0xd0] sm:$0xff] %v500
    %533 = vst [vmem:[#allocation5 + $0xd8] sm:$0xff] %v501
    %534 = vst [vmem:[#allocation5 + $0xe0] sm:$0xff] %v502
    %535 = vst [vmem:[#allocation5 + $0xe8] sm:$0xff] %v503
    %536 = vst [vmem:[#allocation5 + $0xf0] sm:$0xff] %v504
    %537 = vst [vmem:[#allocation5 + $0xf8] sm:$0xff] %v505
    // Predicated region
    $region18: #{tpu_custom_call.1} parent=1 // pred_check
      _
    $region19: #{tpu_custom_call.1} parent=1 // pred_check_branch
      %539 = sbr.rel (0) target = $region21
    $region20: #{tpu_custom_call.1} parent=1 // pred_region
      %s541 = ssub.s32 4096, 4096
      %542 = vsyncadd [#allocation4], %s541
      %s543 = sshll.u32 [#allocation5], 4
      %s544 = int_to_ptr.vmem [resolvable:$true] %s543
      %549 = dma.vmem_to_hbm [thread:$0]  %s544, 4096, %s3, [#allocation4], 256, 256, 16
    $region21: #{tpu_custom_call.1} parent=1 // pred_fallthru
      _
    // Predicated region
    $region22: #{tpu_custom_call.1} parent=1 // pred_check
      _
    $region23: #{tpu_custom_call.1} parent=1 // pred_check_branch
      %551 = sbr.rel (0) target = $region25
    $region24: #{tpu_custom_call.1} parent=1 // pred_region
      %552 = dma.done [#allocation4], 4096
    $region25: #{tpu_custom_call.1} parent=1 // pred_fallthru
      _
    %553 = vsyncpa [#allocation3], 1
    %554 = vsyncpa [#allocation4], 1

</llo_original>
